<compile_context>
chip_gen: v6e
topology: v6e:2x2x1
jax: 0.10.0
libtpu: 0.0.40
codegen_flags: <defaults>
</compile_context>

<pallas_src>
import functools

import jax
import jax.numpy as jnp
from jax.experimental import pallas as pl
from jax.experimental.pallas import tpu as pltpu


def _sum_readout_kernel(x_ref, batch_ref, graph_out_ref, acc_ref):
    """Accumulate a segment-sum (sum readout) over tiles of nodes.

    x_ref:         (tn, d)      node-feature tile
    batch_ref:     (1, tn)      int32 graph id per node (lane-dense row)
    graph_out_ref: (G_pad, d)   output (same block every grid step -> resident)
    acc_ref:       (G_pad, d)   f32 accumulator scratch
    """
    i = pl.program_id(0)

    @pl.when(i == 0)
    def _():
        acc_ref[...] = jnp.zeros_like(acc_ref)

    x_tile = x_ref[...].astype(jnp.float32)            # (tn, d)
    b_row = batch_ref[...]                             # (1, tn) int32
    g_pad = acc_ref.shape[0]
    tn = x_ref.shape[0]

    # One-hot built pre-transposed: (G_pad, tn).  Padded / out-of-range /
    # sentinel (-1) ids never match the iota, so they contribute nothing,
    # matching segment_sum's drop-out-of-bounds behaviour.
    graph_iota = jax.lax.broadcasted_iota(jnp.int32, (g_pad, tn), 0)
    one_hot = (graph_iota == b_row).astype(jnp.float32)          # (G_pad, tn)

    # (G_pad, tn) @ (tn, d) -> (G_pad, d) on the MXU; no transpose needed.
    acc_ref[...] += jnp.dot(one_hot, x_tile, preferred_element_type=jnp.float32)

    @pl.when(i == pl.num_programs(0) - 1)
    def _():
        graph_out_ref[...] = acc_ref[...].astype(graph_out_ref.dtype)


def _round_up(v: int, m: int) -> int:
    return pl.cdiv(v, m) * m


@functools.partial(jax.jit, static_argnames=("num_graphs", "tile_n"))
def identity_model_forward(x: jax.Array, batch: jax.Array, num_graphs: int,
                           tile_n: int = 512):
    """Pallas implementation of IdentityModel.forward.

    :param x:          (N, d) node features.
    :param batch:      (N,)   int graph index per node, values in [0, num_graphs).
    :param num_graphs: number of graphs G in the batch (static).
    :param tile_n:     node-tile size (multiple of 128 recommended; static).
    :return: dict with 'node_embedding' (N, d) and 'graph_embedding' (G, d).
    """
    n, d = x.shape

    # Pad graph count to a sublane-friendly size (>= 8, multiple of 8).
    g_pad = max(8, _round_up(num_graphs, 8))

    # Tile size along N: multiple of 8, at most `tile_n` (itself a multiple of
    # 128 so the lane-dense batch row tiles legally).
    tn = min(tile_n, _round_up(n, 8))
    n_pad = _round_up(n, tn)

    x_p = x if n_pad == n else jnp.pad(x, ((0, n_pad - n), (0, 0)))
    batch_ids = batch.astype(jnp.int32)
    if n_pad != n:
        # Sentinel -1 for padded nodes: matches no graph, contributes nothing.
        batch_ids = jnp.pad(batch_ids, (0, n_pad - n), constant_values=-1)
    batch_row = batch_ids.reshape(1, n_pad)            # lane-dense (1, N_pad)

    graph_emb_pad = pl.pallas_call(
        _sum_readout_kernel,
        out_shape=jax.ShapeDtypeStruct((g_pad, d), x.dtype),
        grid_spec=pltpu.PrefetchScalarGridSpec(
            num_scalar_prefetch=0,
            grid=(n_pad // tn,),
            in_specs=[
                pl.BlockSpec((tn, d), lambda i: (i, 0)),      # x tile
                pl.BlockSpec((1, tn), lambda i: (0, i)),      # batch-id row tile
            ],
            out_specs=pl.BlockSpec((g_pad, d), lambda i: (0, 0)),
            scratch_shapes=[pltpu.VMEM((g_pad, d), jnp.float32)],
        ),
        compiler_params=pltpu.CompilerParams(
            dimension_semantics=("arbitrary",),       # reduction over node tiles
            vmem_limit_bytes=64 * 1024 * 1024,
        ),
    )(x_p, batch_row)

    # Identity node embedding: return x directly, no copy.
    return {
        "node_embedding": x,
        "graph_embedding": graph_emb_pad[:num_graphs],
    }


if __name__ == "__main__":
    key = jax.random.PRNGKey(0)

    # Small shapes: 16 nodes, hidden dim 32, 2 graphs in the batch.
    N, D, G = 16, 32, 2
    x = jax.random.normal(key, (N, D), dtype=jnp.float32)
    # Deterministic, sorted graph assignment (first half graph 0, second half
    # graph 1), matching a typical PyG Batch `batch` vector.
    batch = jnp.concatenate(
        [jnp.zeros((N // 2,), jnp.int32), jnp.ones((N - N // 2,), jnp.int32)]
    )

    out = identity_model_forward(x, batch, num_graphs=G)
    jax.block_until_ready(out)

    # Reference check in plain JAX.
    ref_node = x
    ref_graph = jax.ops.segment_sum(x, batch, num_segments=G)
    assert out["node_embedding"].shape == (N, D)
    assert out["graph_embedding"].shape == (G, D)
    assert jnp.allclose(out["node_embedding"], ref_node, atol=1e-6)
    assert jnp.allclose(out["graph_embedding"], ref_graph, atol=1e-5)

    print("KERNEL_OK")
</pallas_src>

<mosaic_0001>
module attributes {stable_mosaic.version = 11 : i64} {
  func.func @_sum_readout_kernel(%arg0: i32, %arg1: memref<16x32xf32, #tpu.memory_space<vmem>>, %arg2: memref<1x16xi32, #tpu.memory_space<vmem>>, %arg3: memref<8x32xf32, #tpu.memory_space<vmem>>, %arg4: memref<8x32xf32, #tpu.memory_space<vmem>>) attributes {dimension_semantics = [#tpu.dimension_semantics<arbitrary>], iteration_bounds = array<i64: 1>, scalar_prefetch = 0 : i64, scratch_operands = 1 : i64, tpu.core_type = #tpu.core_type<tc>, window_params = [{transform_indices = @transform_0, window_bounds = array<i64: 16, 32>}, {transform_indices = @transform_1, window_bounds = array<i64: 1, 16>}, {pipeline_mode = #tpu.pipeline_mode<synchronous>, transform_indices = @transform_2, window_bounds = array<i64: 8, 32>}]} {
    %c0_i32 = arith.constant 0 : i32
    %0 = arith.cmpi eq, %arg0, %c0_i32 : i32
    %1 = arith.extui %0 : i1 to i32
    %c0_i32_0 = arith.constant 0 : i32
    %2 = arith.cmpi ne, %1, %c0_i32_0 : i32
    scf.if %2 {
      %cst_10 = arith.constant 0.000000e+00 : f32
      %17 = vector.broadcast %cst_10 : f32 to vector<8x32xf32>
      %c0_11 = arith.constant 0 : index
      %c0_12 = arith.constant 0 : index
      %18 = vector.load %arg4[%c0_11, %c0_12] : memref<8x32xf32, #tpu.memory_space<vmem>>, vector<8x32xf32>
      tpu.vector_store %arg4[%c0_11, %c0_12], %17 {strides = array<i32>} : memref<8x32xf32, #tpu.memory_space<vmem>>, vector<8x32xf32>,
    } else {
    }
    %c0 = arith.constant 0 : index
    %c0_1 = arith.constant 0 : index
    %3 = vector.load %arg1[%c0, %c0_1] : memref<16x32xf32, #tpu.memory_space<vmem>>, vector<16x32xf32>
    %c0_2 = arith.constant 0 : index
    %c0_3 = arith.constant 0 : index
    %4 = vector.load %arg2[%c0_2, %c0_3] : memref<1x16xi32, #tpu.memory_space<vmem>>, vector<1x16xi32>
    %5 = tpu.iota {dimensions = array<i32: 0>} : vector<8x16xi32>
    %6 = vector.broadcast %4 : vector<1x16xi32> to vector<8x16xi32>
    %7 = arith.cmpi eq, %5, %6 : vector<8x16xi32>
    %8 = arith.extui %7 : vector<8x16xi1> to vector<8x16xi32>
    %9 = arith.sitofp %8 : vector<8x16xi32> to vector<8x16xf32>
    %c0_4 = arith.constant 0 : index
    %c0_5 = arith.constant 0 : index
    %10 = vector.load %arg4[%c0_4, %c0_5] : memref<8x32xf32, #tpu.memory_space<vmem>>, vector<8x32xf32>
    %cst = arith.constant dense<0.000000e+00> : vector<8x32xf32>
    %11 = tpu.matmul %9, %3, %cst {dimension_numbers = #tpu.dot_dimension_numbers<[1], [0], [0], [1], [0, 0, 1, 1], [], []>} : vector<8x16xf32>, vector<16x32xf32>, vector<8x32xf32> -> vector<8x32xf32>
    %12 = arith.addf %10, %11 : vector<8x32xf32>
    %c0_6 = arith.constant 0 : index
    %c0_7 = arith.constant 0 : index
    %13 = vector.load %arg4[%c0_6, %c0_7] : memref<8x32xf32, #tpu.memory_space<vmem>>, vector<8x32xf32>
    tpu.vector_store %arg4[%c0_6, %c0_7], %12 {strides = array<i32>} : memref<8x32xf32, #tpu.memory_space<vmem>>, vector<8x32xf32>,
    %c0_i32_8 = arith.constant 0 : i32
    %14 = arith.cmpi eq, %arg0, %c0_i32_8 : i32
    %15 = arith.extui %14 : i1 to i32
    %c0_i32_9 = arith.constant 0 : i32
    %16 = arith.cmpi ne, %15, %c0_i32_9 : i32
    scf.if %16 {
      %c0_10 = arith.constant 0 : index
      %c0_11 = arith.constant 0 : index
      %17 = vector.load %arg4[%c0_10, %c0_11] : memref<8x32xf32, #tpu.memory_space<vmem>>, vector<8x32xf32>
      %c0_12 = arith.constant 0 : index
      %c0_13 = arith.constant 0 : index
      %18 = vector.load %arg3[%c0_12, %c0_13] : memref<8x32xf32, #tpu.memory_space<vmem>>, vector<8x32xf32>
      tpu.vector_store %arg3[%c0_12, %c0_13], %17 {strides = array<i32>} : memref<8x32xf32, #tpu.memory_space<vmem>>, vector<8x32xf32>,
    } else {
    }
    return
  }
  func.func @transform_0(%arg0: i32) -> (i32, i32) {
    %c0_i32 = arith.constant 0 : i32
    %c0_i32_0 = arith.constant 0 : i32
    return %arg0, %c0_i32 : i32, i32
  }
  func.func @transform_1(%arg0: i32) -> (i32, i32) {
    %c0_i32 = arith.constant 0 : i32
    %c0_i32_0 = arith.constant 0 : i32
    return %c0_i32, %arg0 : i32, i32
  }
  func.func @transform_2(%arg0: i32) -> (i32, i32) {
    %c0_i32 = arith.constant 0 : i32
    %c0_i32_0 = arith.constant 0 : i32
    %c0_i32_1 = arith.constant 0 : i32
    return %c0_i32, %c0_i32_0 : i32, i32
  }
}

</mosaic_0001>

<llo_original>
// kernel: identity_model_forward.1
$region0: #{identity_model_forward.1}
  #allocation0 [shape = 'u32[]', space=smem, size = 0x4, offset = 0x4, fixed_abs, tag = 'smem constant byte address 0x4 - core index']
  #allocation1 [shape = 'u32[144,128]{1,0:T(1,128)}', space=vmem, size = 0x12000, scoped, tag = 'internal scratch']
  #allocation2 [shape = 'f32[8,32]{1,0:T(8,128)}', space=vmem, size = 0x1000, scoped, tag = 'scratch operand']
  %s0 = inlined_call_operand.hbm [shape: f32[16,32], index: 0, kind: input, shape index: {}]
  %s1 = inlined_call_operand.vmem [shape: s32[1,16], index: 1, kind: input, shape index: {}]
  %s2 = inlined_call_operand.vmem [shape: f32[8,32], index: 2, kind: output, shape index: {}]
  %s3 = sld [smem:[#allocation0]]
  $region30: #{identity_model_forward.1} parent=0
    _
  %s5 = ssub.s32 1, %s3
  %s6 = scalar_select 0, %s5, %s3
  $region1: #{identity_model_forward.1} parent=0
    #allocation3 [shape = 'u8[8192]{0}', space=vmem, size = 0x2000, scoped, tag = 'input window, operand 0, single buffered']
    #allocation4 [shape = 's32[1]{0}', space=sflag, size = 0x4, scoped, tag = 'scoped memory for identity_model_forward.1']
    %7 = vsyncpa [#allocation4], 0
    // Predicated region
    $region2: #{identity_model_forward.1} parent=1 // pred_check
      _
    $region3: #{identity_model_forward.1} parent=1 // pred_check_branch
      %9 = sbr.rel (0) target = $region5
    $region4: #{identity_model_forward.1} parent=1 // pred_region
      %s11 = ssub.s32 256, 256
      %12 = vsyncadd [#allocation4], %s11
      %s13 = sshll.u32 [#allocation3], 4
      %s14 = int_to_ptr.vmem [resolvable:$true] %s13
      %19 = dma.hbm_to_vmem [thread:$0]  %s0, 256, %s14, [#allocation4], 128, 128, 8
    $region5: #{identity_model_forward.1} parent=1 // pred_fallthru
      _
    // Predicated region
    $region6: #{identity_model_forward.1} parent=1 // pred_check
      _
    $region7: #{identity_model_forward.1} parent=1 // pred_check_branch
      %21 = sbr.rel (0) target = $region9
    $region8: #{identity_model_forward.1} parent=1 // pred_region
      _
    $region9: #{identity_model_forward.1} parent=1 // pred_fallthru
      _
    // Predicated region
    $region10: #{identity_model_forward.1} parent=1 // pred_check
      _
    $region11: #{identity_model_forward.1} parent=1 // pred_check_branch
      %23 = sbr.rel (0) target = $region13
    $region12: #{identity_model_forward.1} parent=1 // pred_region
      %24 = dma.done [#allocation4], 256
    $region13: #{identity_model_forward.1} parent=1 // pred_fallthru
      _
    %p25 = scmp.eq.s32.totalorder 0, 0
    // Predicated region
    $region14: #{identity_model_forward.1} parent=1 // pred_check
      %p26 = pneg %p25
    $region15: #{identity_model_forward.1} parent=1 // pred_check_branch
      %28 = sbr.rel (%p26) target = $region17
    $region16: #{identity_model_forward.1} parent=1 // pred_region
      %vm29 = vcmask 261120
      %30 = vst.msk [vmem:[#allocation2] sm:$0xff] %vm29, 0.0
    $region17: #{identity_model_forward.1} parent=1 // pred_fallthru
      _
    %v31 = vld [vmem:[#allocation3] sm:$0xff]
    %v32 = vld [vmem:[#allocation3 + $0x8] sm:$0xff]
    %v33 = vld [vmem:[%s1] sm:$0x1]
    %v34 = vlaneseq
    %v35 = vshrl.u32 %v34, 7
    %v36 = vlaneseq
    %v37 = vshrl.u32 %v36, 7
    %v38 = vsub.s32 0, %v37
    %v39 = vrot.slane %v33, %v38
    %vm40 = vcmp.eq.s32.totalorder %v35, %v39
    %v41 = vsel %vm40, 1, 0
    %v42 = vcvt.s32.f32 %v41
    %v43 = vld [vmem:[#allocation2] sm:$0xff]
    %vm44 = vcmask 130048
    %v46 = vsel %vm44, %v42, 0
    %48 = vmatprep.subr.mxu0 0.0
    %49 = vmatpush1.msra.mxu0 0.0
    %50 = vmatprep.subr.mxu0 0.0
    %51 = vmatpush1.msra.mxu0 0.0
    %52 = vmatprep.subr.mxu0 0.0
    %53 = vmatpush1.msra.mxu0 0.0
    %54 = vmatprep.subr.mxu0 0.0
    %55 = vmatpush1.msra.mxu0 0.0
    %56 = vmatprep.subr.mxu0 0.0
    %57 = vmatpush1.msra.mxu0 0.0
    %58 = vmatprep.subr.mxu0 0.0
    %59 = vmatpush1.msra.mxu0 0.0
    %60 = vmatprep.subr.mxu0 0.0
    %61 = vmatpush1.msra.mxu0 0.0
    %62 = vmatprep.subr.mxu0 0.0
    %63 = vmatpush1.msra.mxu0 0.0
    %64 = vmatprep.subr.mxu0 0.0
    %65 = vmatpush1.msra.mxu0 0.0
    %66 = vmatprep.subr.mxu0 0.0
    %67 = vmatpush1.msra.mxu0 0.0
    %68 = vmatprep.subr.mxu0 0.0
    %69 = vmatpush1.msra.mxu0 0.0
    %70 = vmatprep.subr.mxu0 0.0
    %71 = vmatpush1.msra.mxu0 0.0
    %72 = vmatprep.subr.mxu0 0.0
    %73 = vmatpush1.msra.mxu0 0.0
    %74 = vmatprep.subr.mxu0 0.0
    %75 = vmatpush1.msra.mxu0 0.0
    %76 = vmatprep.subr.mxu0 0.0
    %77 = vmatpush1.msra.mxu0 %v32
    %78 = vmatprep.subr.mxu0 0.0
    %79 = vmatpush1.msra.mxu0 %v31
    %80 = vmatprep.subr.mxu0 0.0
    %81 = vmatpush2.msra.mxu0 0.0
    %82 = vmatprep.subr.mxu0 0.0
    %83 = vmatpush2.msra.mxu0 0.0
    %84 = vmatprep.subr.mxu0 0.0
    %85 = vmatpush2.msra.mxu0 0.0
    %86 = vmatprep.subr.mxu0 0.0
    %87 = vmatpush2.msra.mxu0 0.0
    %88 = vmatprep.subr.mxu0 0.0
    %89 = vmatpush2.msra.mxu0 0.0
    %90 = vmatprep.subr.mxu0 0.0
    %91 = vmatpush2.msra.mxu0 0.0
    %92 = vmatprep.subr.mxu0 0.0
    %93 = vmatpush2.msra.mxu0 0.0
    %94 = vmatprep.subr.mxu0 0.0
    %95 = vmatpush2.msra.mxu0 0.0
    %96 = vmatprep.subr.mxu0 0.0
    %97 = vmatpush2.msra.mxu0 0.0
    %98 = vmatprep.subr.mxu0 0.0
    %99 = vmatpush2.msra.mxu0 0.0
    %100 = vmatprep.subr.mxu0 0.0
    %101 = vmatpush2.msra.mxu0 0.0
    %102 = vmatprep.subr.mxu0 0.0
    %103 = vmatpush2.msra.mxu0 0.0
    %104 = vmatprep.subr.mxu0 0.0
    %105 = vmatpush2.msra.mxu0 0.0
    %106 = vmatprep.subr.mxu0 0.0
    %107 = vmatpush2.msra.mxu0 0.0
    %108 = vmatprep.subr.mxu0 0.0
    %109 = vmatpush2.msra.mxu0 0.0
    %110 = vmatprep.subr.mxu0 0.0
    %111 = vmatpush2.msra.mxu0 0.0
    %112 = vmatprep.mubr.f32.mxu0 0.0
    %113 = vmatmul.mubr.f32.gmra.mxu0 %v46
    %v114 = vpop.f32.mrf.mxu0
    %v115 = vadd.f32 0.0, %v114
    %v116 = vpop.f32.mrf.mxu0
    %117 = vdwg.mxu0
    %v118 = vadd.f32 %v43, %v115
    %vm119 = vcmask 261120
    %120 = vst.msk [vmem:[#allocation2] sm:$0xff] %vm119, %v118
    // Predicated region
    $region18: #{identity_model_forward.1} parent=1 // pred_check
      %p121 = pneg %p25
    $region19: #{identity_model_forward.1} parent=1 // pred_check_branch
      %123 = sbr.rel (%p121) target = $region21
    $region20: #{identity_model_forward.1} parent=1 // pred_region
      %v124 = vld [vmem:[#allocation2] sm:$0xff]
      %125 = vst.msk [vmem:[%s2] sm:$0xff] %vm119, %v124
    $region21: #{identity_model_forward.1} parent=1 // pred_fallthru
      _
    // Predicated region
    $region22: #{identity_model_forward.1} parent=1 // pred_check
      _
    $region23: #{identity_model_forward.1} parent=1 // pred_check_branch
      %127 = sbr.rel (0) target = $region25
    $region24: #{identity_model_forward.1} parent=1 // pred_region
      _
    $region25: #{identity_model_forward.1} parent=1 // pred_fallthru
      _
    // Predicated region
    $region26: #{identity_model_forward.1} parent=1 // pred_check
      _
    $region27: #{identity_model_forward.1} parent=1 // pred_check_branch
      %129 = sbr.rel (0) target = $region29
    $region28: #{identity_model_forward.1} parent=1 // pred_region
      _
    $region29: #{identity_model_forward.1} parent=1 // pred_fallthru
      _
    %130 = vsyncpa [#allocation4], 1

</llo_original>
